<compile_context>
chip_gen: v6e
topology: v6e:2x2x1
jax: 0.10.0
libtpu: 0.0.40
codegen_flags: <defaults>
</compile_context>

<pallas_src>
import jax
import jax.numpy as jnp
from jax import lax
from jax.experimental import pallas as pl
from jax.experimental.pallas import tpu as pltpu

NUM_OPS = 4

# Tile sizing in ELEMENTS per block.
#   forward streams 2 arrays (x in, out): 2M elems -> 8 MiB f32 tile,
#     double-buffered in+out = 32 MiB resident (+ temporaries) under the limit.
#   backward streams 3 arrays (g, x, dx): 1M elems -> 4 MiB f32 tile.
_FWD_TILE_ELEMS = 2 * 1024 * 1024
_BWD_TILE_ELEMS = 1 * 1024 * 1024


def _round_up(x, m):
    return (x + m - 1) // m * m


def _vmem_limit_bytes():
    try:
        cap = int(pltpu.get_tpu_info().vmem_capacity_bytes)
    except Exception:
        cap = 64 << 20                       # conservative (v7x per-core VMEM)
    return min(cap * 7 // 8, 112 << 20)      # 56 MiB on v7x, 112 MiB on v5e/v6e


def _pick_lanes(total):
    # Largest lane width that divides `total` -> zero-copy reshape (no jnp.pad
    # on the way in, no slice copy on the way out).  Only totals that are not a
    # multiple of 128 fall back to the (tiny) pad path.
    for lanes in (512, 256, 128):
        if total % lanes == 0:
            return lanes
    return 512


def _pick_row_tile(rows, lanes, sub, target_elems):
    rt = max(sub, (target_elems // lanes) // sub * sub)
    if rows <= rt:
        return rows                          # single block spanning all rows
    return rt


def _flatten_lane_dense(arr, lanes):
    """Flatten to a (rows, lanes) slab.  Zero-copy when arr.size % lanes == 0."""
    flat = arr.reshape(-1)
    rem = flat.size % lanes
    if rem:
        flat = jnp.pad(flat, (0, lanes - rem))   # only non-128-multiple sizes
    return flat.reshape(flat.size // lanes, lanes)


# ------------------------------ forward kernel ------------------------------ #
def _affine_coeffs(w_ref):
    # identity + brightness + 1.5*contrast - invert  /  0.1*brightness + invert
    a = w_ref[0] + w_ref[1] + 1.5 * w_ref[2] - w_ref[3]
    b = 0.1 * w_ref[1] + w_ref[3]
    return a, b


def _fwd_kernel(w_ref, x_ref, o_ref):
    """One (row_tile, lanes) tile of sum_i w[i] * op_i(x) == a*x + b."""
    a, b = _affine_coeffs(w_ref)
    cdt = o_ref.dtype                        # compute in the I/O dtype
    o_ref[...] = a.astype(cdt) * x_ref[...] + b.astype(cdt)


def _weighted_ops_fwd_impl(op_weights, x):
    orig_shape, dtype, total = x.shape, x.dtype, x.size
    lanes = _pick_lanes(total)
    sub = 16 if dtype == jnp.bfloat16 else 8
    x2 = _flatten_lane_dense(x, lanes)
    rows = x2.shape[0]
    row_tile = _pick_row_tile(rows, lanes, sub, _FWD_TILE_ELEMS)

    # TODO(synk): on v7x, verify both TensorCores drive DMA with "parallel";
    #             otherwise try pltpu.CORE_PARALLEL / pl.core_map.
    out2 = pl.pallas_call(
        _fwd_kernel,
        out_shape=jax.ShapeDtypeStruct((rows, lanes), dtype),
        grid=(pl.cdiv(rows, row_tile),),
        in_specs=[
            pl.BlockSpec(memory_space=pltpu.MemorySpace.SMEM),   # op_weights
            pl.BlockSpec((row_tile, lanes), lambda i: (i, 0)),   # x tile
        ],
        out_specs=pl.BlockSpec((row_tile, lanes), lambda i: (i, 0)),
        compiler_params=pltpu.CompilerParams(
            dimension_semantics=("parallel",),
            vmem_limit_bytes=_vmem_limit_bytes(),
        ),
        cost_estimate=pl.CostEstimate(
            flops=2 * rows * lanes,
            transcendentals=0,
            bytes_accessed=2 * rows * lanes * dtype.itemsize,
        ),
    )(op_weights.astype(jnp.float32), x2)

    out_flat = out2.reshape(-1)
    if rows * lanes != total:                # only the padded path slices
        out_flat = out_flat[:total]
    return out_flat.reshape(orig_shape)


# ------------------------------ backward kernel ----------------------------- #
def _weighted_ops_bwd_impl(op_weights, x, g):
    """Single fused pass: dx = a*g, plus per-lane partial sums of g*x and g."""
    orig_shape, dtype, total = x.shape, x.dtype, x.size
    lanes = _pick_lanes(total)
    sub = 16 if dtype == jnp.bfloat16 else 8
    x2 = _flatten_lane_dense(x, lanes)
    g2 = _flatten_lane_dense(g, lanes)
    rows = x2.shape[0]
    row_tile = _pick_row_tile(rows, lanes, sub, _BWD_TILE_ELEMS)
    ragged = (rows % row_tile) != 0

    def bwd_kernel(w_ref, g_ref, x_ref, dx_ref, pgx_ref, pg_ref):
        i = pl.program_id(0)

        @pl.when(i == 0)
        def _():
            pgx_ref[...] = jnp.zeros_like(pgx_ref)
            pg_ref[...] = jnp.zeros_like(pg_ref)

        a = w_ref[0] + w_ref[1] + 1.5 * w_ref[2] - w_ref[3]
        g32 = g_ref[...].astype(jnp.float32)
        x32 = x_ref[...].astype(jnp.float32)
        dx_ref[...] = (a * g32).astype(dx_ref.dtype)

        gx = g32 * x32
        if ragged:
            # The last grid step's block sticks out past `rows`; those VMEM
            # rows hold unspecified data -> mask them out of the reductions
            # (select, not multiply, so NaN garbage cannot leak through).
            valid = rows - i * row_tile
            keep = lax.broadcasted_iota(jnp.int32, (row_tile, lanes), 0) < valid
            gx = jnp.where(keep, gx, 0.0)
            g32 = jnp.where(keep, g32, 0.0)

        pgx_ref[...] += jnp.sum(gx, axis=0, keepdims=True)
        pg_ref[...] += jnp.sum(g32, axis=0, keepdims=True)

    dx2, pgx, pg = pl.pallas_call(
        bwd_kernel,
        out_shape=(jax.ShapeDtypeStruct((rows, lanes), dtype),
                   jax.ShapeDtypeStruct((1, lanes), jnp.float32),
                   jax.ShapeDtypeStruct((1, lanes), jnp.float32)),
        grid=(pl.cdiv(rows, row_tile),),
        in_specs=[
            pl.BlockSpec(memory_space=pltpu.MemorySpace.SMEM),   # op_weights
            pl.BlockSpec((row_tile, lanes), lambda i: (i, 0)),   # g tile
            pl.BlockSpec((row_tile, lanes), lambda i: (i, 0)),   # x tile
        ],
        out_specs=(pl.BlockSpec((row_tile, lanes), lambda i: (i, 0)),
                   pl.BlockSpec((1, lanes), lambda i: (0, 0)),   # resident acc
                   pl.BlockSpec((1, lanes), lambda i: (0, 0))),  # resident acc
        compiler_params=pltpu.CompilerParams(
            dimension_semantics=("arbitrary",),   # sequential: accumulators
            vmem_limit_bytes=_vmem_limit_bytes(),
        ),
        cost_estimate=pl.CostEstimate(
            flops=6 * rows * lanes,
            transcendentals=0,
            bytes_accessed=3 * rows * lanes * dtype.itemsize,
        ),
    )(op_weights.astype(jnp.float32), g2, x2)

    dx_flat = dx2.reshape(-1)
    if rows * lanes != total:
        dx_flat = dx_flat[:total]
    dx = dx_flat.reshape(orig_shape)

    gx_sum = jnp.sum(pgx)
    g_sum = jnp.sum(pg)
    # d out / d w_i for the 4-op library: [x, x+0.1, 1.5x, 1-x]
    dw = jnp.stack([gx_sum,
                    gx_sum + 0.1 * g_sum,
                    1.5 * gx_sum,
                    g_sum - gx_sum]).astype(op_weights.dtype)
    return dw, dx


# pallas_call has no automatic VJP; define one so gradients reach op_weights
# (straight-through trick on the policy logits) and x.
@jax.custom_vjp
def weighted_ops(op_weights, x):
    return _weighted_ops_fwd_impl(op_weights, x)


def _weighted_ops_fwd(op_weights, x):
    return _weighted_ops_fwd_impl(op_weights, x), (op_weights, x)


def _weighted_ops_bwd(res, g):
    op_weights, x = res
    return _weighted_ops_bwd_impl(op_weights, x, g)


weighted_ops.defvjp(_weighted_ops_fwd, _weighted_ops_bwd)


# -------------------------- pure-JAX reference ------------------------------ #
_OPS = (lambda v: v, lambda v: v + 0.1, lambda v: v * 1.5, lambda v: 1.0 - v)


def _weighted_ops_reference(op_weights, x):
    return sum(op_weights[i] * _OPS[i](x) for i in range(NUM_OPS))


# ------------------------- SubPolicyStage in JAX ---------------------------- #
def sub_policy_stage_forward(logits, x, y, key, training=True, use_pallas=True):
    """Forward pass of SubPolicyStage.

    logits : (NUM_OPS,) float32  -- the nn.Parameter self._weights (init = ones)
    x      : (N, C, H, W)
    y      : (N,) int32 labels
    # TODO(synk): label-dependent ops (mixup/cutmix) would need `y` plumbed into
    #             the kernel; the elementwise op library used here ignores it.
    """
    if training:
        # RelaxedOneHotCategorical(temperature=0.1, logits=logits).rsample()
        g = jax.random.gumbel(key, shape=logits.shape, dtype=logits.dtype)
        wt = jax.nn.softmax((logits + g) / 0.1)
        op_idx = jnp.argmax(wt)
        op_mag = wt[op_idx] / lax.stop_gradient(wt[op_idx])   # forward value == 1.0
        op_weights = jnp.zeros((NUM_OPS,), jnp.float32).at[op_idx].set(op_mag)
    else:
        # Categorical(logits=logits).sample() -> hard one-hot selection
        op_idx = jax.random.categorical(key, logits)
        op_weights = jnp.zeros((NUM_OPS,), jnp.float32).at[op_idx].set(1.0)

    fn = weighted_ops if use_pallas else _weighted_ops_reference
    return fn(op_weights, x), op_weights


def sub_policy_stage_weights(logits, temperature=0.05):
    """The `weights` property: softmax(logits / temperature)."""
    return jax.nn.softmax(logits / temperature)


# ---------------------------------- main ------------------------------------ #
if __name__ == "__main__":
    key = jax.random.PRNGKey(0)
    kx, ky, ksample = jax.random.split(key, 3)

    # Deterministic "parameters": self._weights = ones(len(operations))
    logits = jnp.ones((NUM_OPS,), jnp.float32)

    # Small example inputs: NCHW images + labels.
    N, C, H, W = 2, 4, 16, 16
    x = jax.random.normal(kx, (N, C, H, W), jnp.float32)
    y = jax.random.randint(ky, (N,), 0, 10, jnp.int32)

    out, op_weights = sub_policy_stage_forward(logits, x, y, ksample, training=True)
    out = jax.block_until_ready(out)
    assert out.shape == (N, C, H, W)
    assert jnp.allclose(out, _weighted_ops_reference(op_weights, x),
                        atol=1e-5, rtol=1e-5)

    # Awkward (non-multiple-of-128) element count exercises the pad/slice path.
    x_odd = jax.random.normal(kx, (2, 3, 15, 15), jnp.float32)
    out_odd, w_odd = sub_policy_stage_forward(logits, x_odd, y, ksample, training=True)
    jax.block_until_ready(out_odd)
    assert jnp.allclose(out_odd, _weighted_ops_reference(w_odd, x_odd),
                        atol=1e-5, rtol=1e-5)

    # Gradients flow through the Pallas forward AND fused backward kernels.
    def loss(lg, xx, use_pallas):
        o, _ = sub_policy_stage_forward(lg, xx, y, ksample, training=True,
                                        use_pallas=use_pallas)
        return jnp.sum(o * o)

    gl_k, gx_k = jax.grad(lambda lg, xx: loss(lg, xx, True), argnums=(0, 1))(logits, x)
    gl_r, gx_r = jax.grad(lambda lg, xx: loss(lg, xx, False), argnums=(0, 1))(logits, x)
    assert jnp.allclose(gl_k, gl_r, atol=1e-3, rtol=1e-3)
    assert jnp.allclose(gx_k, gx_r, atol=1e-4, rtol=1e-4)

    # Larger ragged case: rows % row_tile != 0 -> multi-step grid, ragged
    # boundary block in forward, masked boundary reductions in backward.
    x_big = jax.random.normal(kx, (4, 4, 512, 257), jnp.float32)
    out_big, w_big = sub_policy_stage_forward(logits, x_big, y, ksample, training=True)
    jax.block_until_ready(out_big)
    assert jnp.allclose(out_big, _weighted_ops_reference(w_big, x_big),
                        atol=1e-5, rtol=1e-5)

    gl_k, gx_k = jax.grad(lambda lg, xx: loss(lg, xx, True), argnums=(0, 1))(logits, x_big)
    gl_r, gx_r = jax.grad(lambda lg, xx: loss(lg, xx, False), argnums=(0, 1))(logits, x_big)
    assert jnp.allclose(gl_k, gl_r, atol=1e-2, rtol=1e-3)
    assert jnp.allclose(gx_k, gx_r, atol=1e-4, rtol=1e-4)

    # Eval-mode path (hard categorical op selection).
    out_eval, _ = sub_policy_stage_forward(logits, x, y, ksample, training=False)
    jax.block_until_ready(out_eval)

    _ = jax.block_until_ready(sub_policy_stage_weights(logits))

    print("KERNEL_OK")
</pallas_src>

<mosaic_0001>
module attributes {stable_mosaic.version = 11 : i64} {
  func.func @_fwd_kernel(%arg0: i32, %arg1: memref<4xf32, #tpu.memory_space<smem>>, %arg2: memref<4x512xf32, #tpu.memory_space<vmem>>, %arg3: memref<4x512xf32, #tpu.memory_space<vmem>>) attributes {dimension_semantics = [#tpu.dimension_semantics<parallel>], iteration_bounds = array<i64: 1>, scalar_prefetch = 0 : i64, scratch_operands = 0 : i64, tpu.core_type = #tpu.core_type<tc>, window_params = [{transform_indices = @transform_0, window_bounds = array<i64: 4>}, {transform_indices = @transform_1, window_bounds = array<i64: 4, 512>}, {transform_indices = @transform_2, window_bounds = array<i64: 4, 512>}]} {
    %c0 = arith.constant 0 : index
    %0 = memref.load %arg1[%c0] : memref<4xf32, #tpu.memory_space<smem>>
    %c1 = arith.constant 1 : index
    %1 = memref.load %arg1[%c1] : memref<4xf32, #tpu.memory_space<smem>>
    %2 = arith.addf %0, %1 : f32
    %c2 = arith.constant 2 : index
    %3 = memref.load %arg1[%c2] : memref<4xf32, #tpu.memory_space<smem>>
    %cst = arith.constant 1.500000e+00 : f32
    %4 = arith.mulf %cst, %3 : f32
    %5 = arith.addf %2, %4 : f32
    %c3 = arith.constant 3 : index
    %6 = memref.load %arg1[%c3] : memref<4xf32, #tpu.memory_space<smem>>
    %7 = arith.subf %5, %6 : f32
    %c1_0 = arith.constant 1 : index
    %8 = memref.load %arg1[%c1_0] : memref<4xf32, #tpu.memory_space<smem>>
    %cst_1 = arith.constant 1.000000e-01 : f32
    %9 = arith.mulf %cst_1, %8 : f32
    %c3_2 = arith.constant 3 : index
    %10 = memref.load %arg1[%c3_2] : memref<4xf32, #tpu.memory_space<smem>>
    %11 = arith.addf %9, %10 : f32
    %c0_3 = arith.constant 0 : index
    %c0_4 = arith.constant 0 : index
    %12 = vector.load %arg2[%c0_3, %c0_4] : memref<4x512xf32, #tpu.memory_space<vmem>>, vector<4x512xf32>
    %13 = vector.broadcast %7 : f32 to vector<4x512xf32>
    %14 = arith.mulf %13, %12 : vector<4x512xf32>
    %15 = vector.broadcast %11 : f32 to vector<4x512xf32>
    %16 = arith.addf %14, %15 : vector<4x512xf32>
    %c0_5 = arith.constant 0 : index
    %c0_6 = arith.constant 0 : index
    %17 = vector.load %arg3[%c0_5, %c0_6] : memref<4x512xf32, #tpu.memory_space<vmem>>, vector<4x512xf32>
    tpu.vector_store %arg3[%c0_5, %c0_6], %16 {strides = array<i32>} : memref<4x512xf32, #tpu.memory_space<vmem>>, vector<4x512xf32>,
    return
  }
  func.func @transform_0(%arg0: i32) -> i32 {
    %c0_i32 = arith.constant 0 : i32
    %c0_i32_0 = arith.constant 0 : i32
    return %c0_i32 : i32
  }
  func.func @transform_1(%arg0: i32) -> (i32, i32) {
    %c0_i32 = arith.constant 0 : i32
    %c0_i32_0 = arith.constant 0 : i32
    return %arg0, %c0_i32 : i32, i32
  }
  func.func @transform_2(%arg0: i32) -> (i32, i32) {
    %c0_i32 = arith.constant 0 : i32
    %c0_i32_0 = arith.constant 0 : i32
    return %arg0, %c0_i32 : i32, i32
  }
}

</mosaic_0001>

<llo_original>
// kernel: tpu_custom_call.1
$region0: #{tpu_custom_call.1}
  #allocation0 [shape = 'u32[]', space=smem, size = 0x4, offset = 0x4, fixed_abs, tag = 'smem constant byte address 0x4 - core index']
  #allocation1 [shape = 'u32[144,128]{1,0:T(1,128)}', space=vmem, size = 0x12000, scoped, tag = 'internal scratch']
  %s0 = inlined_call_operand.hbm [shape: f32[4], index: 0, kind: input, shape index: {}]
  %s1 = inlined_call_operand.hbm [shape: f32[4,512], index: 1, kind: input, shape index: {}]
  %s2 = inlined_call_operand.hbm [shape: f32[4,512], index: 2, kind: output, shape index: {}]
  %s3 = sld [smem:[#allocation0]]
  $region26: #{tpu_custom_call.1} parent=0
    _
  %s5 = ssub.s32 1, %s3
  %s6 = scalar_select 0, %s5, %s3
  $region1: #{tpu_custom_call.1} parent=0
    #allocation2 [shape = 'u8[512]{0}', space=smem, size = 0x200, scoped, tag = 'input window, operand 0, single buffered']
    #allocation3 [shape = 's32[1]{0}', space=sflag, size = 0x4, scoped, tag = 'scoped memory for tpu_custom_call.1']
    #allocation4 [shape = 's32[1]{0}', space=sflag, size = 0x4, scoped, tag = 'scoped memory for tpu_custom_call.1']
    #allocation5 [shape = 's32[1]{0}', space=sflag, size = 0x4, scoped, tag = 'scoped memory for tpu_custom_call.1']
    #allocation6 [shape = 'u8[8192]{0}', space=vmem, size = 0x2000, scoped, tag = 'input window, operand 1, single buffered']
    #allocation7 [shape = 'u8[8192]{0}', space=vmem, size = 0x2000, scoped, tag = 'output window, operand 0, single buffered']
    %7 = vsyncpa [#allocation5], 0
    %8 = vsyncpa [#allocation3], 0
    %9 = vsyncpa [#allocation4], 0
    // Predicated region
    $region2: #{tpu_custom_call.1} parent=1 // pred_check
      _
    $region3: #{tpu_custom_call.1} parent=1 // pred_check_branch
      %11 = sbr.rel (0) target = $region5
    $region4: #{tpu_custom_call.1} parent=1 // pred_region
      %s13 = ssub.s32 16, 16
      %14 = vsyncadd [#allocation5], %s13
      %17 = dma.hbm_to_smem %s0, 16, [#allocation2], [#allocation5]
    $region5: #{tpu_custom_call.1} parent=1 // pred_fallthru
      _
    // Predicated region
    $region6: #{tpu_custom_call.1} parent=1 // pred_check
      _
    $region7: #{tpu_custom_call.1} parent=1 // pred_check_branch
      %19 = sbr.rel (0) target = $region9
    $region8: #{tpu_custom_call.1} parent=1 // pred_region
      %s21 = ssub.s32 256, 256
      %22 = vsyncadd [#allocation3], %s21
      %s24 = sshll.u32 [#allocation6], 4
      %s25 = int_to_ptr.vmem [resolvable:$true] %s24
      %27 = dma.hbm_to_vmem [thread:$0]  %s1, 256, %s25, [#allocation3]
    $region9: #{tpu_custom_call.1} parent=1 // pred_fallthru
      _
    // Predicated region
    $region10: #{tpu_custom_call.1} parent=1 // pred_check
      _
    $region11: #{tpu_custom_call.1} parent=1 // pred_check_branch
      %29 = sbr.rel (0) target = $region13
    $region12: #{tpu_custom_call.1} parent=1 // pred_region
      %30 = dma.done [#allocation5], 16
    $region13: #{tpu_custom_call.1} parent=1 // pred_fallthru
      _
    // Predicated region
    $region14: #{tpu_custom_call.1} parent=1 // pred_check
      _
    $region15: #{tpu_custom_call.1} parent=1 // pred_check_branch
      %32 = sbr.rel (0) target = $region17
    $region16: #{tpu_custom_call.1} parent=1 // pred_region
      %33 = dma.done [#allocation3], 256
    $region17: #{tpu_custom_call.1} parent=1 // pred_fallthru
      _
    %34 = sfence
    %s35 = sld [smem:[#allocation2]]
    %s36 = sld [smem:[#allocation2 + $0x1]]
    %s37 = sadd.f32 %s35, %s36
    %s38 = sld [smem:[#allocation2 + $0x2]]
    %s39 = smul.f32 %s38, 1.5
    %s40 = sadd.f32 %s37, %s39
    %s41 = sld [smem:[#allocation2 + $0x3]]
    %s42 = ssub.f32 %s40, %s41
    %s43 = smul.f32 %s36, 0.1
    %s44 = sadd.f32 %s43, %s41
    %v45 = vld [vmem:[#allocation6] sm:$0xff]
    %v46 = vld [vmem:[#allocation6 + $0x8] sm:$0xff]
    %v47 = vstv %s42
    %v48 = vmul.f32 %v47, %v45
    %v49 = vmul.f32 %v47, %v46
    %v50 = vstv %s44
    %v51 = vadd.f32 %v48, %v50
    %v52 = vadd.f32 %v49, %v50
    %53 = vst [vmem:[#allocation7] sm:$0xff] %v51
    %54 = vst [vmem:[#allocation7 + $0x8] sm:$0xff] %v52
    // Predicated region
    $region18: #{tpu_custom_call.1} parent=1 // pred_check
      _
    $region19: #{tpu_custom_call.1} parent=1 // pred_check_branch
      %56 = sbr.rel (0) target = $region21
    $region20: #{tpu_custom_call.1} parent=1 // pred_region
      %s58 = ssub.s32 256, 256
      %59 = vsyncadd [#allocation4], %s58
      %s61 = sshll.u32 [#allocation7], 4
      %s62 = int_to_ptr.vmem [resolvable:$true] %s61
      %64 = dma.vmem_to_hbm [thread:$0]  %s62, 256, %s2, [#allocation4]
    $region21: #{tpu_custom_call.1} parent=1 // pred_fallthru
      _
    // Predicated region
    $region22: #{tpu_custom_call.1} parent=1 // pred_check
      _
    $region23: #{tpu_custom_call.1} parent=1 // pred_check_branch
      %66 = sbr.rel (0) target = $region25
    $region24: #{tpu_custom_call.1} parent=1 // pred_region
      %67 = dma.done [#allocation4], 256
    $region25: #{tpu_custom_call.1} parent=1 // pred_fallthru
      _
    %68 = vsyncpa [#allocation3], 1
    %69 = vsyncpa [#allocation4], 1
    %70 = vsyncpa [#allocation5], 1

</llo_original>
